<compile_context>
chip_gen: v7x
topology: tpu7x:2x2x1
jax: 0.10.0
libtpu: 0.0.40
codegen_flags: <defaults>
</compile_context>

<pallas_src>
import functools
import numpy as np
import jax
import jax.numpy as jnp
from jax.experimental import pallas as pl
from jax.experimental.pallas import tpu as pltpu


# ----------------------------------------------------------------------------
# Pallas kernels
# ----------------------------------------------------------------------------

def matmul_bn_kernel(*refs, relu, has_res):
    """Multi-K-step: O = act((A @ W) * scale + bias [+ residual]), K on grid axis 2."""
    if has_res:
        a_ref, w_ref, s_ref, b_ref, r_ref, o_ref, acc_ref = refs
    else:
        a_ref, w_ref, s_ref, b_ref, o_ref, acc_ref = refs
        r_ref = None

    k = pl.program_id(2)

    @pl.when(k == 0)
    def _():
        acc_ref[...] = jnp.zeros_like(acc_ref)

    acc_ref[...] += jnp.dot(a_ref[...], w_ref[...],
                            preferred_element_type=jnp.float32)

    @pl.when(k == pl.num_programs(2) - 1)
    def _():
        y = acc_ref[...] * s_ref[...] + b_ref[...]
        if has_res:
            y = y + r_ref[...].astype(jnp.float32)
        if relu:
            y = jnp.maximum(y, 0.0)
        o_ref[...] = y.astype(o_ref.dtype)


def matmul_bn_onepass_kernel(*refs, relu, has_res):
    """Single-K-step specialization: no scratch, no zero-init, one fused pass."""
    if has_res:
        a_ref, w_ref, s_ref, b_ref, r_ref, o_ref = refs
    else:
        a_ref, w_ref, s_ref, b_ref, o_ref = refs
        r_ref = None
    y = jnp.dot(a_ref[...], w_ref[...], preferred_element_type=jnp.float32)
    y = y * s_ref[...] + b_ref[...]
    if has_res:
        y = y + r_ref[...].astype(jnp.float32)
    if relu:
        y = jnp.maximum(y, 0.0)
    o_ref[...] = y.astype(o_ref.dtype)


def conv3x3_kernel(*refs, Ho, Wo, relu, has_res):
    """Direct 3x3x3 stride-1 conv. D-offset on grid axis 3; (kh, kw) offsets unrolled
    in-kernel as static shifted slices of the (Hp, Wp, Cin) padded plane."""
    if has_res:
        x_ref, w_ref, s_ref, b_ref, r_ref, o_ref, acc_ref = refs
    else:
        x_ref, w_ref, s_ref, b_ref, o_ref, acc_ref = refs
        r_ref = None

    i = pl.program_id(3)

    @pl.when(i == 0)
    def _():
        acc_ref[...] = jnp.zeros_like(acc_ref)

    cin = x_ref.shape[-1]
    for j in range(3):
        for k in range(3):
            a = x_ref[j:j + Ho, k:k + Wo, :].reshape(Ho * Wo, cin)
            acc_ref[...] += jnp.dot(a, w_ref[j, k],
                                    preferred_element_type=jnp.float32)

    @pl.when(i == pl.num_programs(3) - 1)
    def _():
        y = acc_ref[...] * s_ref[...] + b_ref[...]
        if has_res:
            y = y + r_ref[...].astype(jnp.float32)
        if relu:
            y = jnp.maximum(y, 0.0)
        o_ref[...] = y.astype(o_ref.dtype)


def avgpool_kernel(x_ref, o_ref, acc_ref, *, inv_count):
    """Tiled AdaptiveAvgPool3d(1): sum over spatial chunks into a resident f32 acc."""
    s = pl.program_id(0)

    @pl.when(s == 0)
    def _():
        acc_ref[...] = jnp.zeros_like(acc_ref)

    acc_ref[...] += jnp.sum(x_ref[...].astype(jnp.float32), axis=1)

    @pl.when(s == pl.num_programs(0) - 1)
    def _():
        o_ref[...] = acc_ref[...] * inv_count


# ----------------------------------------------------------------------------
# Tile selection / VMEM limit helpers
# ----------------------------------------------------------------------------

def _largest_divisor(dim, candidates):
    for c in candidates:
        if dim % c == 0:
            return c
    return None


def _vmem_limit(est_bytes):
    # Explicit scoped-VMEM limit: 2x the block estimate, floor 32 MiB (>= defaults on
    # all generations for the sizes used here), capped below v7x's 64 MiB physical.
    return int(min(max(2 * est_bytes, 32 * 1024 * 1024), 56 * 1024 * 1024))


def _choose_tiles(M, N, K):
    pad_m = 0
    tm = _largest_divisor(M, (512, 256, 128, 64, 32, 16, 8))
    if tm is None:
        if M <= 512:
            tm = M                       # small full-M block
        else:
            tm = 128                     # guard the tm=M fallback: pad M instead
            pad_m = (-M) % 128
    Mp = M + pad_m
    # tn: full-N on wide layers when there are >= 2 M blocks, else 256/128/full.
    if N % 512 == 0 and Mp // tm >= 2:
        tn = 512
    elif N % 256 == 0:
        tn = 256
    elif N % 128 == 0:
        tn = 128
    else:
        tn = N
    # Keep >= 2 (M, N) output blocks for megacore: split tm first; never shrink tn
    # below 256 when N is 256-aligned.
    if (Mp // tm) * (N // tn) < 2:
        if tm % 16 == 0:
            tm //= 2
        elif tn % 256 == 0 and tn >= 512:
            tn //= 2
    # tk: largest multiple of 128 dividing K (capped at 2048), else the full K.
    if K % 128 == 0:
        tk = min(K, 2048)
        tk -= tk % 128
        while tk >= 128 and K % tk != 0:
            tk -= 128
        if tk < 128:
            tk = K
    else:
        tk = K
    return tm, tn, tk, pad_m


# ----------------------------------------------------------------------------
# Fused matmul + BN (+ residual) (+ ReLU)
# ----------------------------------------------------------------------------

def fused_matmul(a, w, scale, bias, residual=None, relu=False,
                 out_dtype=jnp.bfloat16, in_dtype=jnp.bfloat16):
    """act((a @ w) * scale + bias [+ residual]); a:(M,K) w:(K,N) scale/bias:(N,)."""
    M, K = a.shape
    K2, N = w.shape
    assert K == K2
    tm, tn, tk, pad_m = _choose_tiles(M, N, K)

    a = a.astype(in_dtype)
    w = w.astype(in_dtype)
    if residual is not None:
        residual = residual.astype(in_dtype)
    if pad_m:
        a = jnp.pad(a, ((0, pad_m), (0, 0)))
        if residual is not None:
            residual = jnp.pad(residual, ((0, pad_m), (0, 0)))
    Mp = M + pad_m

    scale = scale.reshape(1, N).astype(jnp.float32)
    bias = bias.reshape(1, N).astype(jnp.float32)

    n_k = K // tk
    in_bytes = jnp.dtype(in_dtype).itemsize
    out_bytes = jnp.dtype(out_dtype).itemsize

    est = (2 * (tm * tk + tk * tn) * in_bytes + 2 * tm * tn * out_bytes
           + 4 * tn * 4 * 2)
    if residual is not None:
        est += 2 * tm * tn * in_bytes
    if n_k > 1:
        est += tm * tn * 4

    flops = 2 * Mp * N * K
    bytes_accessed = (Mp * K + K * N) * in_bytes + Mp * N * out_bytes
    if residual is not None:
        bytes_accessed += Mp * N * in_bytes

    common = dict(
        out_shape=jax.ShapeDtypeStruct((Mp, N), out_dtype),
        compiler_params=pltpu.CompilerParams(
            dimension_semantics=(("parallel", "parallel") if n_k == 1
                                 else ("parallel", "parallel", "arbitrary")),
            vmem_limit_bytes=_vmem_limit(est)),
        cost_estimate=pl.CostEstimate(flops=int(flops), transcendentals=0,
                                      bytes_accessed=int(bytes_accessed)),
    )

    if n_k == 1:
        args = [a, w, scale, bias]
        in_specs = [
            pl.BlockSpec((tm, tk), lambda i, j: (i, 0)),
            pl.BlockSpec((tk, tn), lambda i, j: (0, j)),
            pl.BlockSpec((1, tn), lambda i, j: (0, j)),
            pl.BlockSpec((1, tn), lambda i, j: (0, j)),
        ]
        if residual is not None:
            args.append(residual)
            in_specs.append(pl.BlockSpec((tm, tn), lambda i, j: (i, j)))
        kernel = functools.partial(matmul_bn_onepass_kernel, relu=relu,
                                   has_res=residual is not None)
        out = pl.pallas_call(
            kernel,
            grid_spec=pltpu.PrefetchScalarGridSpec(
                num_scalar_prefetch=0,
                grid=(Mp // tm, N // tn),
                in_specs=in_specs,
                out_specs=pl.BlockSpec((tm, tn), lambda i, j: (i, j))),
            **common)(*args)
    else:
        args = [a, w, scale, bias]
        in_specs = [
            pl.BlockSpec((tm, tk), lambda i, j, k: (i, k)),
            pl.BlockSpec((tk, tn), lambda i, j, k: (k, j)),
            pl.BlockSpec((1, tn), lambda i, j, k: (0, j)),
            pl.BlockSpec((1, tn), lambda i, j, k: (0, j)),
        ]
        if residual is not None:
            args.append(residual)
            in_specs.append(pl.BlockSpec((tm, tn), lambda i, j, k: (i, j)))
        kernel = functools.partial(matmul_bn_kernel, relu=relu,
                                   has_res=residual is not None)
        out = pl.pallas_call(
            kernel,
            grid_spec=pltpu.PrefetchScalarGridSpec(
                num_scalar_prefetch=0,
                grid=(Mp // tm, N // tn, n_k),
                in_specs=in_specs,
                out_specs=pl.BlockSpec((tm, tn), lambda i, j, k: (i, j)),
                scratch_shapes=[pltpu.VMEM((tm, tn), jnp.float32)]),
            **common)(*args)

    if pad_m:
        out = out[:M]
    return out


# ----------------------------------------------------------------------------
# Direct (fused, no HBM im2col) 3x3x3 stride-1 convolution
# ----------------------------------------------------------------------------

def conv3x3_direct(x, w, scale, bias, relu, residual=None,
                   out_dtype=jnp.bfloat16):
    """3x3x3, stride 1, padding 1 Conv3d + BN (+ residual) (+ ReLU), fully fused."""
    n, d, h, wd, cin = x.shape
    kd, kh, kw, cin2, cout = w.shape
    assert (kd, kh, kw) == (3, 3, 3) and cin == cin2
    Do, Ho, Wo = d, h, wd
    M2 = Ho * Wo

    xp = jnp.pad(x.astype(jnp.bfloat16),
                 ((0, 0), (1, 1), (1, 1), (1, 1), (0, 0)))
    Hp, Wp = Ho + 2, Wo + 2
    wr = w.astype(jnp.bfloat16)                            # (3, 3, 3, cin, cout)
    scale2 = scale.reshape(1, cout).astype(jnp.float32)
    bias2 = bias.reshape(1, cout).astype(jnp.float32)
    tn = cout                                              # cout <= 512

    args = [xp, wr, scale2, bias2]
    in_specs = [
        pl.BlockSpec((None, None, Hp, Wp, cin),
                     lambda nn, dd, jc, i: (nn, dd + i, 0, 0, 0)),
        pl.BlockSpec((None, 3, 3, cin, tn),
                     lambda nn, dd, jc, i: (i, 0, 0, 0, jc)),
        pl.BlockSpec((1, tn), lambda nn, dd, jc, i: (0, jc)),
        pl.BlockSpec((1, tn), lambda nn, dd, jc, i: (0, jc)),
    ]
    if residual is not None:
        res = residual.reshape(n, Do, M2, cout).astype(jnp.bfloat16)
        args.append(res)
        in_specs.append(pl.BlockSpec((None, None, M2, tn),
                                     lambda nn, dd, jc, i: (nn, dd, 0, jc)))

    out_bytes = jnp.dtype(out_dtype).itemsize
    est = (2 * Hp * Wp * cin * 2 + 2 * 9 * cin * tn * 2
           + 2 * M2 * tn * out_bytes + M2 * tn * 4 + 4 * tn * 4 * 2)
    if residual is not None:
        est += 2 * M2 * tn * 2

    flops = 2 * n * Do * M2 * 27 * cin * cout
    bytes_accessed = (3 * n * (Do + 2) * Hp * Wp * cin * 2
                      + n * Do * 27 * cin * cout * 2
                      + n * Do * M2 * cout * out_bytes)
    if residual is not None:
        bytes_accessed += n * Do * M2 * cout * 2

    kernel = functools.partial(conv3x3_kernel, Ho=Ho, Wo=Wo, relu=relu,
                               has_res=residual is not None)
    out = pl.pallas_call(
        kernel,
        out_shape=jax.ShapeDtypeStruct((n, Do, M2, cout), out_dtype),
        grid_spec=pltpu.PrefetchScalarGridSpec(
            num_scalar_prefetch=0,
            grid=(n, Do, cout // tn, 3),
            in_specs=in_specs,
            out_specs=pl.BlockSpec((None, None, M2, tn),
                                   lambda nn, dd, jc, i: (nn, dd, 0, jc)),
            scratch_shapes=[pltpu.VMEM((M2, tn), jnp.float32)]),
        compiler_params=pltpu.CompilerParams(
            dimension_semantics=("parallel", "parallel", "parallel", "arbitrary"),
            vmem_limit_bytes=_vmem_limit(est)),
        cost_estimate=pl.CostEstimate(flops=int(flops), transcendentals=0,
                                      bytes_accessed=int(bytes_accessed)),
    )(*args)
    return out.reshape(n, Do, Ho, Wo, cout)


# ----------------------------------------------------------------------------
# Global average pool (tiled reduction)
# ----------------------------------------------------------------------------

def global_avg_pool(x):
    # x: (N, D, H, W, C) bf16 -> (N, C) f32
    n, d, h, w, c = x.shape
    S = d * h * w
    x3 = x.reshape(n, S, c)
    ts = _largest_divisor(S, (2048, 1024, 512, 256, 128, 64, 32, 16, 8))
    if ts is None:
        ts = S
    return pl.pallas_call(
        functools.partial(avgpool_kernel, inv_count=float(1.0 / S)),
        out_shape=jax.ShapeDtypeStruct((n, c), jnp.float32),
        grid_spec=pltpu.PrefetchScalarGridSpec(
            num_scalar_prefetch=0,
            grid=(S // ts,),
            in_specs=[pl.BlockSpec((n, ts, c), lambda s: (0, s, 0))],
            out_specs=pl.BlockSpec((n, c), lambda s: (0, 0)),
            scratch_shapes=[pltpu.VMEM((n, c), jnp.float32)]),
        compiler_params=pltpu.CompilerParams(
            dimension_semantics=("arbitrary",)),
    )(x3)


# ----------------------------------------------------------------------------
# Conv3d dispatch (direct kernel / strided-slice / im2col + fused Pallas matmul)
# ----------------------------------------------------------------------------

def extract_patches_3d(x, ksize, stride, padding):
    """x: (N, D, H, W, C) -> (N*Do*Ho*Wo, kd*kh*kw*C) patch matrix (same dtype)."""
    kd, kh, kw = ksize
    sd, sh, sw = stride
    pd, ph, pw = padding
    x = jnp.pad(x, ((0, 0), (pd, pd), (ph, ph), (pw, pw), (0, 0)))
    n, dp, hp, wp, c = x.shape
    do = (dp - kd) // sd + 1
    ho = (hp - kh) // sh + 1
    wo = (wp - kw) // sw + 1
    slices = []
    for i in range(kd):
        for j in range(kh):
            for k in range(kw):
                slices.append(x[:, i:i + do * sd:sd,
                                j:j + ho * sh:sh,
                                k:k + wo * sw:sw, :])
    p = jnp.stack(slices, axis=-2)                       # (N,Do,Ho,Wo,P,C)
    p = p.reshape(n * do * ho * wo, kd * kh * kw * c)    # kernel-pos major, C minor
    return p, (n, do, ho, wo)


def conv_bn(x, w, scale, bias, stride, padding, relu, residual=None):
    """Conv3d (no bias) + eval-mode BN (+ residual) (+ ReLU), fused in Pallas."""
    kd, kh, kw, cin, cout = w.shape
    if (kd, kh, kw) == (3, 3, 3) and stride == (1, 1, 1) and padding == (1, 1, 1):
        # Fused direct conv: no HBM im2col materialization.
        return conv3x3_direct(x, w, scale, bias, relu, residual=residual)
    if (kd, kh, kw) == (1, 1, 1):
        # 1x1x1 downsample conv: plain strided slice, no im2col inflation.
        sd, sh, sw = stride
        xs = x[:, ::sd, ::sh, ::sw, :]
        n, do, ho, wo, _ = xs.shape
        patches = xs.reshape(n * do * ho * wo, cin)
    else:
        # TODO(synk): stem + stride-2 3x3x3 convs still build an im2col matrix in HBM.
        patches, (n, do, ho, wo) = extract_patches_3d(
            x, (kd, kh, kw), stride, padding)
    res2d = residual.reshape(-1, cout) if residual is not None else None
    out = fused_matmul(patches, w.reshape(kd * kh * kw * cin, cout),
                       scale, bias, residual=res2d, relu=relu)
    return out.reshape(n, do, ho, wo, cout)


def basic_block(x, p):
    s = p['stride']
    identity = x
    out = conv_bn(x, p['w1'], p['s1'], p['b1'],
                  stride=(s, s, s), padding=(1, 1, 1), relu=True)
    if 'wd' in p:  # downsample path: 1x1x1 conv stride s + BN
        identity = conv_bn(x, p['wd'], p['sd'], p['bd'],
                           stride=(s, s, s), padding=(0, 0, 0), relu=False)
    # conv2 + BN, residual add, ReLU  (fused into one Pallas call)
    out = conv_bn(out, p['w2'], p['s2'], p['b2'],
                  stride=(1, 1, 1), padding=(1, 1, 1), relu=True,
                  residual=identity)
    return out


# ----------------------------------------------------------------------------
# Parameter initialization (deterministic, synthetic — mirrors r3d_18 shapes)
# ----------------------------------------------------------------------------

def init_params(key):
    keys = iter(jax.random.split(key, 96))

    def conv_w(kd, kh, kw, cin, cout):
        fan_in = kd * kh * kw * cin
        return (jax.random.normal(next(keys), (kd, kh, kw, cin, cout), jnp.float32)
                * np.sqrt(2.0 / fan_in).astype(np.float32))

    def bn(c):
        gamma = 1.0 + 0.1 * jax.random.normal(next(keys), (c,), jnp.float32)
        beta = 0.1 * jax.random.normal(next(keys), (c,), jnp.float32)
        eps = 1e-5
        # eval mode, running_mean=0, running_var=1 folded into scale/bias
        scale = gamma / jnp.sqrt(1.0 + eps)
        bias = beta
        return scale, bias

    params = {}
    # stem: Conv3d(3, 64, k=(3,7,7), s=(1,2,2), p=(1,3,3)) + BN + ReLU
    params['stem_w'] = conv_w(3, 7, 7, 3, 64)
    params['stem_s'], params['stem_b'] = bn(64)

    layers = []
    cin = 64
    for cout, first_stride, nblocks in [(64, 1, 2), (128, 2, 2),
                                        (256, 2, 2), (512, 2, 2)]:
        blocks = []
        for bi in range(nblocks):
            s = first_stride if bi == 0 else 1
            blk = {'stride': s}
            blk['w1'] = conv_w(3, 3, 3, cin, cout)
            blk['s1'], blk['b1'] = bn(cout)
            blk['w2'] = conv_w(3, 3, 3, cout, cout)
            blk['s2'], blk['b2'] = bn(cout)
            if s != 1 or cin != cout:
                blk['wd'] = conv_w(1, 1, 1, cin, cout)
                blk['sd'], blk['bd'] = bn(cout)
            blocks.append(blk)
            cin = cout
        layers.append(blocks)
    params['layers'] = layers

    # fc: Linear(512, 400)   (stored pre-transposed: (512, 400))
    params['fc_w'] = 0.02 * jax.random.normal(next(keys), (512, 400), jnp.float32)
    params['fc_b'] = jnp.zeros((400,), jnp.float32)
    return params


# ----------------------------------------------------------------------------
# Full forward pass (r3d_18)
# ----------------------------------------------------------------------------

def resnet3d_forward(params, x_ncdhw):
    # NCDHW (PyTorch) -> NDHWC (kernel layout), bf16 activations end-to-end.
    x = jnp.transpose(x_ncdhw, (0, 2, 3, 4, 1)).astype(jnp.bfloat16)

    x = conv_bn(x, params['stem_w'], params['stem_s'], params['stem_b'],
                stride=(1, 2, 2), padding=(1, 3, 3), relu=True)

    for blocks in params['layers']:
        for blk in blocks:
            x = basic_block(x, blk)

    pooled = global_avg_pool(x)                                   # (N, 512) f32
    logits = fused_matmul(pooled, params['fc_w'],
                          jnp.ones((400,), jnp.float32), params['fc_b'],
                          relu=False, out_dtype=jnp.float32,
                          in_dtype=jnp.float32)                   # (N, 400)
    return logits


# ----------------------------------------------------------------------------
# main
# ----------------------------------------------------------------------------

if __name__ == "__main__":
    key = jax.random.PRNGKey(0)
    pkey, xkey, ckey = jax.random.split(key, 3)

    # sanity check 1: fused Pallas matmul (single-K-step path) vs plain JAX
    a = jax.random.normal(ckey, (37, 53), jnp.float32)
    b = jax.random.normal(jax.random.fold_in(ckey, 1), (53, 19), jnp.float32)
    a16 = a.astype(jnp.bfloat16).astype(jnp.float32)
    b16 = b.astype(jnp.bfloat16).astype(jnp.float32)
    ref = jnp.maximum(a16 @ b16 * 1.3 + 0.2, 0.0)
    got = fused_matmul(a, b, 1.3 * jnp.ones((19,)), 0.2 * jnp.ones((19,)),
                       relu=True, out_dtype=jnp.float32)
    np.testing.assert_allclose(np.asarray(got), np.asarray(ref),
                               rtol=2e-2, atol=2e-2)

    # sanity check 2: fused direct 3x3x3 conv vs an im2col + plain-JAX reference
    xs = jax.random.normal(jax.random.fold_in(ckey, 2),
                           (1, 4, 6, 6, 16), jnp.float32).astype(jnp.bfloat16)
    ws = 0.1 * jax.random.normal(jax.random.fold_in(ckey, 3),
                                 (3, 3, 3, 16, 32), jnp.float32)
    got_c = conv3x3_direct(xs, ws, 1.1 * jnp.ones((32,), jnp.float32),
                           0.05 * jnp.ones((32,), jnp.float32),
                           relu=True, out_dtype=jnp.float32)
    patches, (pn, pd, ph, pw) = extract_patches_3d(xs, (3, 3, 3), (1, 1, 1),
                                                   (1, 1, 1))
    wref = ws.astype(jnp.bfloat16).astype(jnp.float32).reshape(27 * 16, 32)
    ref_c = jnp.maximum(patches.astype(jnp.float32) @ wref * 1.1 + 0.05, 0.0)
    ref_c = ref_c.reshape(pn, pd, ph, pw, 32)
    np.testing.assert_allclose(np.asarray(got_c), np.asarray(ref_c),
                               rtol=2e-2, atol=2e-2)

    params = init_params(pkey)
    # PyTorch-convention input: (batch, channels=3, T, H, W)
    x = jax.random.normal(xkey, (2, 3, 8, 32, 32), jnp.float32)

    out = resnet3d_forward(params, x)
    out = jax.block_until_ready(out)

    assert out.shape == (2, 400), out.shape
    assert bool(jnp.all(jnp.isfinite(out)))
    print("KERNEL_OK")
</pallas_src>

<mosaic_0001>
module attributes {stable_mosaic.version = 11 : i64} {
  func.func @matmul_bn_onepass_kernel(%arg0: i32, %arg1: i32, %arg2: memref<37x53xbf16, #tpu.memory_space<vmem>>, %arg3: memref<53x19xbf16, #tpu.memory_space<vmem>>, %arg4: memref<1x19xf32, #tpu.memory_space<vmem>>, %arg5: memref<1x19xf32, #tpu.memory_space<vmem>>, %arg6: memref<37x19xf32, #tpu.memory_space<vmem>>) attributes {dimension_semantics = [#tpu.dimension_semantics<parallel>, #tpu.dimension_semantics<parallel>], iteration_bounds = array<i64: 1, 1>, scalar_prefetch = 0 : i64, scratch_operands = 0 : i64, tpu.core_type = #tpu.core_type<tc>, window_params = [{transform_indices = @transform_0, window_bounds = array<i64: 37, 53>}, {transform_indices = @transform_1, window_bounds = array<i64: 53, 19>}, {transform_indices = @transform_2, window_bounds = array<i64: 1, 19>}, {transform_indices = @transform_3, window_bounds = array<i64: 1, 19>}, {transform_indices = @transform_4, window_bounds = array<i64: 37, 19>}]} {
    %c0 = arith.constant 0 : index
    %c0_0 = arith.constant 0 : index
    %0 = vector.load %arg2[%c0, %c0_0] : memref<37x53xbf16, #tpu.memory_space<vmem>>, vector<37x53xbf16>
    %c0_1 = arith.constant 0 : index
    %c0_2 = arith.constant 0 : index
    %1 = vector.load %arg3[%c0_1, %c0_2] : memref<53x19xbf16, #tpu.memory_space<vmem>>, vector<53x19xbf16>
    %cst = arith.constant dense<0.000000e+00> : vector<37x19xf32>
    %2 = tpu.matmul %0, %1, %cst {dimension_numbers = #tpu.dot_dimension_numbers<[1], [0], [0], [1], [0, 0, 1, 1], [], []>} : vector<37x53xbf16>, vector<53x19xbf16>, vector<37x19xf32> -> vector<37x19xf32>
    %c0_3 = arith.constant 0 : index
    %c0_4 = arith.constant 0 : index
    %3 = vector.load %arg4[%c0_3, %c0_4] : memref<1x19xf32, #tpu.memory_space<vmem>>, vector<1x19xf32>
    %4 = vector.broadcast %3 : vector<1x19xf32> to vector<37x19xf32>
    %5 = arith.mulf %2, %4 : vector<37x19xf32>
    %c0_5 = arith.constant 0 : index
    %c0_6 = arith.constant 0 : index
    %6 = vector.load %arg5[%c0_5, %c0_6] : memref<1x19xf32, #tpu.memory_space<vmem>>, vector<1x19xf32>
    %7 = vector.broadcast %6 : vector<1x19xf32> to vector<37x19xf32>
    %8 = arith.addf %5, %7 : vector<37x19xf32>
    %cst_7 = arith.constant 0.000000e+00 : f32
    %9 = vector.broadcast %cst_7 : f32 to vector<37x19xf32>
    %10 = arith.maximumf %8, %9 : vector<37x19xf32>
    %c0_8 = arith.constant 0 : index
    %c0_9 = arith.constant 0 : index
    %11 = vector.load %arg6[%c0_8, %c0_9] : memref<37x19xf32, #tpu.memory_space<vmem>>, vector<37x19xf32>
    tpu.vector_store %arg6[%c0_8, %c0_9], %10 {strides = array<i32>} : memref<37x19xf32, #tpu.memory_space<vmem>>, vector<37x19xf32>,
    return
  }
  func.func @transform_0(%arg0: i32, %arg1: i32) -> (i32, i32) {
    %c0_i32 = arith.constant 0 : i32
    %c0_i32_0 = arith.constant 0 : i32
    return %arg0, %c0_i32 : i32, i32
  }
  func.func @transform_1(%arg0: i32, %arg1: i32) -> (i32, i32) {
    %c0_i32 = arith.constant 0 : i32
    %c0_i32_0 = arith.constant 0 : i32
    return %c0_i32, %arg1 : i32, i32
  }
  func.func @transform_2(%arg0: i32, %arg1: i32) -> (i32, i32) {
    %c0_i32 = arith.constant 0 : i32
    %c0_i32_0 = arith.constant 0 : i32
    return %c0_i32, %arg1 : i32, i32
  }
  func.func @transform_3(%arg0: i32, %arg1: i32) -> (i32, i32) {
    %c0_i32 = arith.constant 0 : i32
    %c0_i32_0 = arith.constant 0 : i32
    return %c0_i32, %arg1 : i32, i32
  }
  func.func @transform_4(%arg0: i32, %arg1: i32) -> (i32, i32) {
    %c0_i32 = arith.constant 0 : i32
    return %arg0, %arg1 : i32, i32
  }
}

</mosaic_0001>

<llo_original>
// kernel: tpu_custom_call.1
$region0: #{tpu_custom_call.1}
  #allocation0 [shape = 'u32[]', space=smem, size = 0x4, offset = 0x4, fixed_abs, tag = 'smem constant byte address 0x4 - core index']
  #allocation1 [shape = 'u32[144,128]{1,0:T(1,128)}', space=vmem, size = 0x12000, scoped, tag = 'internal scratch']
  %s0 = inlined_call_operand.vmem [shape: bf16[37,53], index: 0, kind: input, shape index: {}]
  %s1 = inlined_call_operand.vmem [shape: bf16[53,19], index: 1, kind: input, shape index: {}]
  %s2 = inlined_call_operand.vmem [shape: f32[1,19], index: 2, kind: input, shape index: {}]
  %s3 = inlined_call_operand.vmem [shape: f32[1,19], index: 3, kind: input, shape index: {}]
  %s4 = inlined_call_operand.vmem [shape: f32[37,19], index: 4, kind: output, shape index: {}]
  %s5 = sld [smem:[#allocation0]]
  $region26: #{tpu_custom_call.1} parent=0
    _
  %s7 = ssub.s32 1, %s5
  %s8 = scalar_select 0, %s7, %s5
  // Predicated region
  $region2: #{tpu_custom_call.1} parent=0 // pred_check
    _
  $region3: #{tpu_custom_call.1} parent=0 // pred_check_branch
    %10 = sbr.rel (0) target = $region5
  $region4: #{tpu_custom_call.1} parent=0 // pred_region
    _
  $region5: #{tpu_custom_call.1} parent=0 // pred_fallthru
    _
  // Predicated region
  $region6: #{tpu_custom_call.1} parent=0 // pred_check
    _
  $region7: #{tpu_custom_call.1} parent=0 // pred_check_branch
    %12 = sbr.rel (0) target = $region9
  $region8: #{tpu_custom_call.1} parent=0 // pred_region
    _
  $region9: #{tpu_custom_call.1} parent=0 // pred_fallthru
    _
  // Predicated region
  $region10: #{tpu_custom_call.1} parent=0 // pred_check
    _
  $region11: #{tpu_custom_call.1} parent=0 // pred_check_branch
    %14 = sbr.rel (0) target = $region13
  $region12: #{tpu_custom_call.1} parent=0 // pred_region
    _
  $region13: #{tpu_custom_call.1} parent=0 // pred_fallthru
    _
  // Predicated region
  $region14: #{tpu_custom_call.1} parent=0 // pred_check
    _
  $region15: #{tpu_custom_call.1} parent=0 // pred_check_branch
    %16 = sbr.rel (0) target = $region17
  $region16: #{tpu_custom_call.1} parent=0 // pred_region
    _
  $region17: #{tpu_custom_call.1} parent=0 // pred_fallthru
    _
  %v18 = vld [vmem:[%s0] sm:$0xf]
  %v19 = vld [vmem:[%s0 + $0x4] sm:$0xf]
  %v20 = vld [vmem:[%s0 + $0x8] sm:$0xf]
  %v21 = vld [vmem:[%s0 + $0xc] sm:$0xf]
  %v22 = vld [vmem:[%s0 + $0x10] sm:$0x7]
  %v23 = vld [vmem:[%s1] sm:$0xf]
  %v24 = vld [vmem:[%s1 + $0x4] sm:$0xf]
  %v25 = vld [vmem:[%s1 + $0x8] sm:$0xf]
  %v26 = vld [vmem:[%s1 + $0xc] sm:$0xf]
  %v27 = vld [vmem:[%s1 + $0x10] sm:$0xf]
  %v28 = vld [vmem:[%s1 + $0x14] sm:$0xf]
  %v29 = vld [vmem:[%s1 + $0x18] sm:$0x7]
  %v35 = vunpack.c.l.b16 %v18
  %v36 = vunpack.c.l.b16 %v19
  %v37 = vunpack.c.l.b16 %v20
  %v38 = vunpack.c.l.b16 %v21
  %v39 = vunpack.c.l.b16 %v22
  %v40 = vpack.c.b16 %v36, %v35
  %v41 = vpack.c.b16 %v38, %v37
  %v42 = vpack.c.b16 %v39, %v39
  %v50 = vunpack.c.l.b16 %v23
  %v51 = vunpack.c.l.b16 %v24
  %v52 = vunpack.c.l.b16 %v25
  %v53 = vunpack.c.l.b16 %v26
  %v54 = vunpack.c.l.b16 %v27
  %v55 = vunpack.c.l.b16 %v28
  %v56 = vunpack.c.l.b16 %v29
  %v57 = vpack.c.b16 %v51, %v50
  %v58 = vpack.c.b16 %v53, %v52
  %v59 = vpack.c.b16 %v55, %v54
  %v60 = vpack.c.b16 %v56, %v56
  %vm64 = vcmask 433152
  %v66 = vsel %vm64, %v40, 0
  %v69 = vsel %vm64, %v41, 0
  %v72 = vsel %vm64, %v42, 0
  %vm74 = vcmask 1041408
  %vm75 = vcmask 1042432
  %v76 = vsel %vm74, 4294967295, 65535
  %v77 = vsel %vm75, %v76, 0
  %v79 = vand.u32 %v60, %v77
  %81 = vmatprep.subr.bf16.mxu0 0
  %82 = vmatpush1.bf16.msra.mxu0 %v57
  %83 = vmatprep.subr.bf16.mxu0 0
  %84 = vmatpush1.bf16.msra.mxu0 %v58
  %85 = vmatprep.subr.bf16.mxu0 0
  %86 = vmatpush1.bf16.msra.mxu0 %v59
  %87 = vmatprep.subr.bf16.mxu0 0
  %88 = vmatpush1.bf16.msra.mxu0 %v79
  %89 = vmatprep.subr.bf16.mxu0 0
  %90 = vmatpush1.bf16.msra.mxu0 0
  %91 = vmatprep.subr.bf16.mxu0 0
  %92 = vmatpush1.bf16.msra.mxu0 0
  %93 = vmatprep.subr.bf16.mxu0 0
  %94 = vmatpush1.bf16.msra.mxu0 0
  %95 = vmatprep.subr.bf16.mxu0 0
  %96 = vmatpush1.bf16.msra.mxu0 0
  %97 = vmatprep.subr.bf16.mxu0 0
  %98 = vmatpush1.bf16.msra.mxu0 0
  %99 = vmatprep.subr.bf16.mxu0 0
  %100 = vmatpush1.bf16.msra.mxu0 0
  %101 = vmatprep.subr.bf16.mxu0 0
  %102 = vmatpush1.bf16.msra.mxu0 0
  %103 = vmatprep.subr.bf16.mxu0 0
  %104 = vmatpush1.bf16.msra.mxu0 0
  %105 = vmatprep.subr.bf16.mxu0 0
  %106 = vmatpush1.bf16.msra.mxu0 0
  %107 = vmatprep.subr.bf16.mxu0 0
  %108 = vmatpush1.bf16.msra.mxu0 0
  %109 = vmatprep.subr.bf16.mxu0 0
  %110 = vmatpush1.bf16.msra.mxu0 0
  %111 = vmatprep.subr.bf16.mxu0 0
  %112 = vmatpush1.bf16.msra.mxu0 0
  %113 = vmatprep.mubr.bf16.mxu0 0
  %114 = vmatmul.mubr.bf16.gmra.mrb[0].mxu0 %v66
  %v115 = vpop.f32.mrb[0].mxu0
  %v116 = vadd.f32 0.0, %v115
  %v117 = vpop.f32.mrb[0].mxu0
  %v118 = vpop.f32.mrb[0].mxu0
  %v119 = vadd.f32 0.0, %v118
  %v120 = vpop.f32.mrb[0].mxu0
  %121 = vmatprep.mubr.bf16.mxu0 0
  %122 = vmatmul.mubr.bf16.gmra.mrb[0].mxu0 %v69
  %v123 = vpop.f32.mrb[0].mxu0
  %v124 = vadd.f32 0.0, %v123
  %v125 = vpop.f32.mrb[0].mxu0
  %v126 = vpop.f32.mrb[0].mxu0
  %v127 = vadd.f32 0.0, %v126
  %v128 = vpop.f32.mrb[0].mxu0
  %129 = vmatprep.mubr.bf16.mxu0 0
  %130 = vmatmul.mubr.bf16.gmra.mrb[0].mxu0 %v72
  %v131 = vpop.f32.mrb[0].mxu0
  %v132 = vadd.f32 0.0, %v131
  %v133 = vpop.f32.mrb[0].mxu0
  %v134 = vpop.f32.mrb[0].mxu0
  %v135 = vpop.f32.mrb[0].mxu0
  %136 = vdwg.mxu0
  %v137 = vld [vmem:[%s2] sm:$0x1]
  %v139 = vlaneseq
  %v140 = vshrl.u32 %v139, 7
  %v141 = vsub.s32 0, %v140
  %v142 = vrot.slane %v137, %v141
  %v144 = vmul.f32 %v116, %v142
  %v145 = vmul.f32 %v119, %v142
  %v146 = vmul.f32 %v124, %v142
  %v147 = vmul.f32 %v127, %v142
  %v148 = vmul.f32 %v132, %v142
  %v149 = vld [vmem:[%s3] sm:$0x1]
  %v151 = vlaneseq
  %v152 = vshrl.u32 %v151, 7
  %v153 = vsub.s32 0, %v152
  %v154 = vrot.slane %v149, %v153
  %v156 = vadd.f32 %v144, %v154
  %v157 = vadd.f32 %v145, %v154
  %v158 = vadd.f32 %v146, %v154
  %v159 = vadd.f32 %v147, %v154
  %v160 = vadd.f32 %v148, %v154
  %v161 = vmax.f32 %v156, 0.0
  %v162 = vmax.f32 %v157, 0.0
  %v163 = vmax.f32 %v158, 0.0
  %v164 = vmax.f32 %v159, 0.0
  %v165 = vmax.f32 %v160, 0.0
  %vm166 = vcmask 154624
  %167 = vst.msk [vmem:[%s4] sm:$0xff] %vm166, %v161
  %168 = vst.msk [vmem:[%s4 + $0x8] sm:$0xff] %vm166, %v162
  %169 = vst.msk [vmem:[%s4 + $0x10] sm:$0xff] %vm166, %v163
  %170 = vst.msk [vmem:[%s4 + $0x18] sm:$0xff] %vm166, %v164
  %vm171 = vcmask 151552
  %172 = vst.msk [vmem:[%s4 + $0x20] sm:$0x1f] %vm171, %v165
  // Predicated region
  $region18: #{tpu_custom_call.1} parent=0 // pred_check
    _
  $region19: #{tpu_custom_call.1} parent=0 // pred_check_branch
    %174 = sbr.rel (0) target = $region21
  $region20: #{tpu_custom_call.1} parent=0 // pred_region
    _
  $region21: #{tpu_custom_call.1} parent=0 // pred_fallthru
    _
  // Predicated region
  $region22: #{tpu_custom_call.1} parent=0 // pred_check
    _
  $region23: #{tpu_custom_call.1} parent=0 // pred_check_branch
    %176 = sbr.rel (0) target = $region25
  $region24: #{tpu_custom_call.1} parent=0 // pred_region
    _
  $region25: #{tpu_custom_call.1} parent=0 // pred_fallthru
    _

</llo_original>
